<compile_context>
chip_gen: v7x
topology: tpu7x:2x2x1
jax: 0.10.0
libtpu: 0.0.40
codegen_flags: <defaults>
</compile_context>

<pallas_src>
import functools

import jax
import jax.numpy as jnp
from jax.experimental import pallas as pl
from jax.experimental.pallas import tpu as pltpu

PATCH_LENS = (4, 8, 16)
MAX_P = 16                                   # coarsest scale; others are refinements of its rows
N_GROUPS = sum(MAX_P // p for p in PATCH_LENS)   # 4 + 2 + 1 = 7 fused column groups


def _fused_embed_kernel(x_ref, w_ref, b_ref, o_ref):
    """One grid step = one batch tile.  Single tall MXU matmul:
    M = batch_tile * (S//16), K = 16*C, N = 7*d_model (lane-dense output)."""
    o_ref[...] = (jnp.dot(x_ref[...], w_ref[...],
                          preferred_element_type=jnp.float32)
                  + b_ref[...]).astype(o_ref.dtype)


def _vmem_capacity_bytes():
    """Per-core VMEM capacity; conservative fallback = v7x's 64 MiB."""
    try:
        return int(getattr(pltpu.get_tpu_info(), "vmem_capacity_bytes",
                           64 * 1024 * 1024))
    except Exception:
        return 64 * 1024 * 1024


def _pick_batch_tile(B, rows_per_batch, bytes_per_batch, tile_budget, sublane=8):
    """Largest batch tile that (a) divides B, (b) keeps the block sublane dim 8-aligned or
    full-extent, (c) fits the VMEM tile budget, preferring >= 2 grid steps (v7x dual TC)."""
    divisors = [bt for bt in range(1, B + 1) if B % bt == 0]
    aligned = [bt for bt in divisors
               if (bt * rows_per_batch) % sublane == 0 or bt == B]
    fits = [bt for bt in aligned if bt * bytes_per_batch <= tile_budget] or [min(aligned)]
    multi = [bt for bt in fits if bt <= B // 2]       # >= 2 parallel grid steps when possible
    return max(multi) if multi else max(fits)


def _build_fused_params(weights, biases, C, d_model):
    """Block-structured fused weight (16*C, 7*d_model) and bias (1, 7*d_model)."""
    K = MAX_P * C
    w_cols, b_cols = [], []
    for p, W, b in zip(PATCH_LENS, weights, biases):
        kin = C * p
        for t in range(MAX_P // p):
            w_cols.append(jnp.pad(W, ((t * kin, K - (t + 1) * kin), (0, 0))))
            b_cols.append(b)
    return jnp.concatenate(w_cols, axis=1), jnp.concatenate(b_cols, axis=1)


def multi_scale_patch_embed(x, weights, biases, d_model):
    """x: (B, S, C) float32.  weights[i]: (C*PATCH_LENS[i], d_model) (transposed vs torch).
    biases[i]: (1, d_model).  Returns (B, sum(S//p), d_model)."""
    B, S, C = x.shape
    assert S >= MAX_P, "seq_len must be >= 16 for patch lengths (4, 8, 16)"
    n_patches = [S // p for p in PATCH_LENS]

    if S % MAX_P != 0:
        # TODO(synk): ragged seq_len (S % 16 != 0) truncates each scale differently, so the
        # fused single-read view does not apply; fall back to plain XLA for that rare case.
        feats = []
        for p, n, W, b in zip(PATCH_LENS, n_patches, weights, biases):
            xu = x[:, :n * p, :].reshape(B, n, p, C)
            xu = jnp.transpose(xu, (0, 3, 1, 2)).reshape(B, n, C * p)
            feats.append(xu @ W + b)
        return jnp.concatenate(feats, axis=1)

    n4, n8, n16 = n_patches
    K = MAX_P * C
    N = N_GROUPS * d_model

    # Single data-moving preprocessing step: (B, S, C) -> (B, C, S); the reshape into rows
    # of the coarsest (p=16) view is then a free row-major re-view.  The kernel reads x
    # from HBM exactly once (previous version DMA'd the same activation bytes 3x).
    x16 = jnp.transpose(x, (0, 2, 1)).reshape(B * n16, K)

    w_big, b_big = _build_fused_params(weights, biases, C, d_model)

    dtype_bytes = jnp.dtype(x.dtype).itemsize
    cap = _vmem_capacity_bytes()
    # Constant-index weight/bias blocks are never re-fetched: charge them once (not 2x).
    weight_bytes = dtype_bytes * (int(w_big.size) + int(b_big.size))
    # Double-buffered input tile + output tile per batch element.
    bytes_per_batch = 2 * dtype_bytes * n16 * (K + N)
    tile_budget = max(int(cap * 0.6) - weight_bytes, bytes_per_batch)

    bt = _pick_batch_tile(B, n16, bytes_per_batch, tile_budget)
    grid = (B // bt,)
    rows = bt * n16

    out = pl.pallas_call(
        _fused_embed_kernel,
        out_shape=jax.ShapeDtypeStruct((B * n16, N), x.dtype),
        grid=grid,
        in_specs=[pl.BlockSpec((rows, K), lambda i: (i, 0)),
                  pl.BlockSpec(w_big.shape, lambda i: (0, 0)),   # VMEM-resident
                  pl.BlockSpec(b_big.shape, lambda i: (0, 0))],  # VMEM-resident
        out_specs=pl.BlockSpec((rows, N), lambda i: (i, 0)),
        compiler_params=pltpu.CompilerParams(
            dimension_semantics=("parallel",),          # both TCs on v7x when grid >= 2
            vmem_limit_bytes=int(cap * 0.75)),          # ~96 MiB on v5e/v6e, ~48 MiB on v7x
        cost_estimate=pl.CostEstimate(
            flops=2 * (B * n16) * K * N,
            transcendentals=0,
            bytes_accessed=dtype_bytes * (int(x16.size) + int(w_big.size)
                                          + int(b_big.size) + B * n16 * N)),
    )(x16, w_big, b_big)

    # Un-interleave the fused column groups back into the three scales.  These slices /
    # reshapes / concat are a single cheap XLA pass over the output; the proper home for
    # this (and the final permute) is the backbone kernel, which is not available here.
    big = out.reshape(B, n16, N)
    o4 = big[:, :, :4 * d_model].reshape(B, n4, d_model)
    o8 = big[:, :, 4 * d_model:6 * d_model].reshape(B, n8, d_model)
    o16 = big[:, :, 6 * d_model:].reshape(B, n16, d_model)
    return jnp.concatenate([o4, o8, o16], axis=1)


def model_forward(x, weights, biases, d_model):
    """Model.forward: multi-scale patch embed -> concat -> backbone -> permute(0, 2, 1)."""
    feats = multi_scale_patch_embed(x, weights, biases, d_model)   # (B, P_total, d_model)
    # TODO(synk): MFTNet_backbone (self.model) source not provided; identity pass-through.
    y = feats
    return jnp.transpose(y, (0, 2, 1))                             # (B, d_model, P_total)


if __name__ == "__main__":
    B, S, C, d_model = 2, 32, 4, 32   # seq_len divisible by 4, 8 and 16

    key = jax.random.PRNGKey(0)
    k_x, k4, k8, k16 = jax.random.split(key, 4)
    x = jax.random.normal(k_x, (B, S, C), dtype=jnp.float32)

    weights, biases = [], []
    for plen, k in zip(PATCH_LENS, (k4, k8, k16)):
        kin = C * plen
        bound = 1.0 / (kin ** 0.5)            # nn.Linear default uniform init bound
        kw, kb = jax.random.split(k)
        # stored transposed relative to torch's (out, in): kernel computes x @ W + b
        weights.append(jax.random.uniform(kw, (kin, d_model), jnp.float32, -bound, bound))
        biases.append(jax.random.uniform(kb, (1, d_model), jnp.float32, -bound, bound))

    fwd = jax.jit(functools.partial(model_forward, d_model=d_model))
    out = fwd(x, weights, biases)
    jax.block_until_ready(out)

    # Pure-JAX reference of the documented forward (identity backbone).
    def reference(x, weights, biases):
        B_, S_, C_ = x.shape
        feats = []
        for p, W, b in zip(PATCH_LENS, weights, biases):
            n = S_ // p
            xu = x[:, :n * p, :].reshape(B_, n, p, C_)
            xu = jnp.transpose(xu, (0, 3, 1, 2)).reshape(B_, n, C_ * p)
            feats.append(jnp.einsum('bpk,kd->bpd', xu, W,
                                    precision=jax.lax.Precision.HIGHEST) + b)
        return jnp.transpose(jnp.concatenate(feats, axis=1), (0, 2, 1))

    ref = reference(x, weights, biases)
    expected_patches = S // 4 + S // 8 + S // 16
    assert out.shape == (B, d_model, expected_patches), out.shape
    assert out.dtype == jnp.float32
    assert jnp.allclose(out, ref, atol=1e-3, rtol=1e-3), float(jnp.max(jnp.abs(out - ref)))

    print("KERNEL_OK")
</pallas_src>

<mosaic_0001>
module attributes {stable_mosaic.version = 11 : i64} {
  func.func @_fused_embed_kernel(%arg0: i32, %arg1: memref<4x64xf32, #tpu.memory_space<vmem>>, %arg2: memref<64x224xf32, #tpu.memory_space<vmem>>, %arg3: memref<1x224xf32, #tpu.memory_space<vmem>>, %arg4: memref<4x224xf32, #tpu.memory_space<vmem>>) attributes {dimension_semantics = [#tpu.dimension_semantics<parallel>], iteration_bounds = array<i64: 1>, scalar_prefetch = 0 : i64, scratch_operands = 0 : i64, tpu.core_type = #tpu.core_type<tc>, window_params = [{transform_indices = @transform_0, window_bounds = array<i64: 4, 64>}, {pipeline_mode = #tpu.pipeline_mode<synchronous>, transform_indices = @transform_1, window_bounds = array<i64: 64, 224>}, {pipeline_mode = #tpu.pipeline_mode<synchronous>, transform_indices = @transform_2, window_bounds = array<i64: 1, 224>}, {transform_indices = @transform_3, window_bounds = array<i64: 4, 224>}]} {
    %c0 = arith.constant 0 : index
    %c0_0 = arith.constant 0 : index
    %0 = vector.load %arg1[%c0, %c0_0] : memref<4x64xf32, #tpu.memory_space<vmem>>, vector<4x64xf32>
    %c0_1 = arith.constant 0 : index
    %c0_2 = arith.constant 0 : index
    %1 = vector.load %arg2[%c0_1, %c0_2] : memref<64x224xf32, #tpu.memory_space<vmem>>, vector<64x224xf32>
    %cst = arith.constant dense<0.000000e+00> : vector<4x224xf32>
    %2 = tpu.matmul %0, %1, %cst {dimension_numbers = #tpu.dot_dimension_numbers<[1], [0], [0], [1], [0, 0, 1, 1], [], []>} : vector<4x64xf32>, vector<64x224xf32>, vector<4x224xf32> -> vector<4x224xf32>
    %c0_3 = arith.constant 0 : index
    %c0_4 = arith.constant 0 : index
    %3 = vector.load %arg3[%c0_3, %c0_4] : memref<1x224xf32, #tpu.memory_space<vmem>>, vector<1x224xf32>
    %4 = vector.broadcast %3 : vector<1x224xf32> to vector<4x224xf32>
    %5 = arith.addf %2, %4 : vector<4x224xf32>
    %c0_5 = arith.constant 0 : index
    %c0_6 = arith.constant 0 : index
    %6 = vector.load %arg4[%c0_5, %c0_6] : memref<4x224xf32, #tpu.memory_space<vmem>>, vector<4x224xf32>
    tpu.vector_store %arg4[%c0_5, %c0_6], %5 {strides = array<i32>} : memref<4x224xf32, #tpu.memory_space<vmem>>, vector<4x224xf32>,
    return
  }
  func.func @transform_0(%arg0: i32) -> (i32, i32) {
    %c0_i32 = arith.constant 0 : i32
    %c0_i32_0 = arith.constant 0 : i32
    return %arg0, %c0_i32 : i32, i32
  }
  func.func @transform_1(%arg0: i32) -> (i32, i32) {
    %c0_i32 = arith.constant 0 : i32
    %c0_i32_0 = arith.constant 0 : i32
    %c0_i32_1 = arith.constant 0 : i32
    return %c0_i32, %c0_i32_0 : i32, i32
  }
  func.func @transform_2(%arg0: i32) -> (i32, i32) {
    %c0_i32 = arith.constant 0 : i32
    %c0_i32_0 = arith.constant 0 : i32
    %c0_i32_1 = arith.constant 0 : i32
    return %c0_i32, %c0_i32_0 : i32, i32
  }
  func.func @transform_3(%arg0: i32) -> (i32, i32) {
    %c0_i32 = arith.constant 0 : i32
    %c0_i32_0 = arith.constant 0 : i32
    return %arg0, %c0_i32 : i32, i32
  }
}

</mosaic_0001>

<llo_original>
// kernel: model_forward.1
$region0: #{model_forward.1}
  #allocation0 [shape = 'u32[]', space=smem, size = 0x4, offset = 0x4, fixed_abs, tag = 'smem constant byte address 0x4 - core index']
  #allocation1 [shape = 'u32[144,128]{1,0:T(1,128)}', space=vmem, size = 0x12000, scoped, tag = 'internal scratch']
  %s0 = inlined_call_operand.vmem [shape: f32[4,64], index: 0, kind: input, shape index: {}]
  %s1 = inlined_call_operand.vmem [shape: f32[64,224], index: 1, kind: input, shape index: {}]
  %s2 = inlined_call_operand.vmem [shape: f32[1,224], index: 2, kind: input, shape index: {}]
  %s3 = inlined_call_operand.vmem [shape: f32[4,224], index: 3, kind: output, shape index: {}]
  %s4 = sld [smem:[#allocation0]]
  $region22: #{model_forward.1} parent=0
    _
  %s6 = ssub.s32 1, %s4
  %s7 = scalar_select 0, %s6, %s4
  // Predicated region
  $region2: #{model_forward.1} parent=0 // pred_check
    _
  $region3: #{model_forward.1} parent=0 // pred_check_branch
    %9 = sbr.rel (0) target = $region5
  $region4: #{model_forward.1} parent=0 // pred_region
    _
  $region5: #{model_forward.1} parent=0 // pred_fallthru
    _
  // Predicated region
  $region6: #{model_forward.1} parent=0 // pred_check
    _
  $region7: #{model_forward.1} parent=0 // pred_check_branch
    %11 = sbr.rel (0) target = $region9
  $region8: #{model_forward.1} parent=0 // pred_region
    _
  $region9: #{model_forward.1} parent=0 // pred_fallthru
    _
  // Predicated region
  $region10: #{model_forward.1} parent=0 // pred_check
    _
  $region11: #{model_forward.1} parent=0 // pred_check_branch
    %13 = sbr.rel (0) target = $region13
  $region12: #{model_forward.1} parent=0 // pred_region
    _
  $region13: #{model_forward.1} parent=0 // pred_fallthru
    _
  %v14 = vld [vmem:[%s0] sm:$0xf]
  %v15 = vld [vmem:[%s1] sm:$0xff]
  %v16 = vld [vmem:[%s1 + $0x8] sm:$0xff]
  %v17 = vld [vmem:[%s1 + $0x10] sm:$0xff]
  %v18 = vld [vmem:[%s1 + $0x18] sm:$0xff]
  %v19 = vld [vmem:[%s1 + $0x20] sm:$0xff]
  %v20 = vld [vmem:[%s1 + $0x28] sm:$0xff]
  %v21 = vld [vmem:[%s1 + $0x30] sm:$0xff]
  %v22 = vld [vmem:[%s1 + $0x38] sm:$0xff]
  %v23 = vld [vmem:[%s1 + $0x40] sm:$0xff]
  %v24 = vld [vmem:[%s1 + $0x48] sm:$0xff]
  %v25 = vld [vmem:[%s1 + $0x50] sm:$0xff]
  %v26 = vld [vmem:[%s1 + $0x58] sm:$0xff]
  %v27 = vld [vmem:[%s1 + $0x60] sm:$0xff]
  %v28 = vld [vmem:[%s1 + $0x68] sm:$0xff]
  %v29 = vld [vmem:[%s1 + $0x70] sm:$0xff]
  %v30 = vld [vmem:[%s1 + $0x78] sm:$0xff]
  %v31 = vld [vmem:[%s2] sm:$0x3]
  %v33 = vlaneseq
  %v34 = vshrl.u32 %v33, 7
  %v35 = vsub.s32 0, %v34
  %v36 = vrot.slane %v31, %v35
  %v37 = vlaneseq
  %v38 = vshrl.u32 %v37, 7
  %v39 = vsub.s32 1, %v38
  %v40 = vrot.slane %v31, %v39
  %vm43 = vcmask 523264
  %v45 = vsel %vm43, %v14, 0
  %47 = vmatprep.subr.mxu0 %v16
  %48 = vmatpush1.msra.mxu0 %v15
  %49 = vmatprep.subr.mxu0 %v18
  %50 = vmatpush1.msra.mxu0 %v17
  %51 = vmatprep.subr.mxu0 %v20
  %52 = vmatpush1.msra.mxu0 %v19
  %53 = vmatprep.subr.mxu0 %v22
  %54 = vmatpush1.msra.mxu0 %v21
  %55 = vmatprep.subr.mxu0 %v24
  %56 = vmatpush1.msra.mxu0 %v23
  %57 = vmatprep.subr.mxu0 %v26
  %58 = vmatpush1.msra.mxu0 %v25
  %59 = vmatprep.subr.mxu0 %v28
  %60 = vmatpush1.msra.mxu0 %v27
  %61 = vmatprep.subr.mxu0 %v30
  %62 = vmatpush1.msra.mxu0 %v29
  %63 = vmatprep.subr.mxu0 0.0
  %64 = vmatpush1.msra.mxu0 0.0
  %65 = vmatprep.subr.mxu0 0.0
  %66 = vmatpush1.msra.mxu0 0.0
  %67 = vmatprep.subr.mxu0 0.0
  %68 = vmatpush1.msra.mxu0 0.0
  %69 = vmatprep.subr.mxu0 0.0
  %70 = vmatpush1.msra.mxu0 0.0
  %71 = vmatprep.subr.mxu0 0.0
  %72 = vmatpush1.msra.mxu0 0.0
  %73 = vmatprep.subr.mxu0 0.0
  %74 = vmatpush1.msra.mxu0 0.0
  %75 = vmatprep.subr.mxu0 0.0
  %76 = vmatpush1.msra.mxu0 0.0
  %77 = vmatprep.subr.mxu0 0.0
  %78 = vmatpush1.msra.mxu0 0.0
  %79 = vmatprep.subr.mxu0 0.0
  %80 = vmatpush1.msra.mxu0 0.0
  %81 = vmatprep.subr.mxu0 0.0
  %82 = vmatpush1.msra.mxu0 0.0
  %83 = vmatprep.subr.mxu0 0.0
  %84 = vmatpush1.msra.mxu0 0.0
  %85 = vmatprep.subr.mxu0 0.0
  %86 = vmatpush1.msra.mxu0 0.0
  %87 = vmatprep.subr.mxu0 0.0
  %88 = vmatpush1.msra.mxu0 0.0
  %89 = vmatprep.subr.mxu0 0.0
  %90 = vmatpush1.msra.mxu0 0.0
  %91 = vmatprep.subr.mxu0 0.0
  %92 = vmatpush1.msra.mxu0 0.0
  %93 = vmatprep.subr.mxu0 0.0
  %94 = vmatpush1.msra.mxu0 0.0
  %95 = vmatprep.subr.mxu0 0.0
  %96 = vmatpush1.msra.mxu0 0.0
  %97 = vmatprep.subr.mxu0 0.0
  %98 = vmatpush1.msra.mxu0 0.0
  %99 = vmatprep.subr.mxu0 0.0
  %100 = vmatpush1.msra.mxu0 0.0
  %101 = vmatprep.subr.mxu0 0.0
  %102 = vmatpush1.msra.mxu0 0.0
  %103 = vmatprep.subr.mxu0 0.0
  %104 = vmatpush1.msra.mxu0 0.0
  %105 = vmatprep.subr.mxu0 0.0
  %106 = vmatpush1.msra.mxu0 0.0
  %107 = vmatprep.subr.mxu0 0.0
  %108 = vmatpush1.msra.mxu0 0.0
  %109 = vmatprep.subr.mxu0 0.0
  %110 = vmatpush1.msra.mxu0 0.0
  %111 = vmatprep.mubr.f32.mxu0 0.0
  %112 = vmatmul.mubr.f32.gmra.mrb[0].mxu0 %v45
  %v113 = vpop.f32.mrb[0].mxu0
  %v114 = vadd.f32 %v36, %v113
  %v115 = vpop.f32.mrb[0].mxu0
  %v116 = vadd.f32 %v40, %v115
  %117 = vdwg.mxu0
  %v120 = vcombine.low %v114, %v116
  %vm122 = vcmask 1043456
  %vm123 = vcmask 785412
  %vm124 = vmor %vm123, %vm122
  %125 = vst.msk [vmem:[%s3] sm:$0xff] %vm124, %v120
  // Predicated region
  $region14: #{model_forward.1} parent=0 // pred_check
    _
  $region15: #{model_forward.1} parent=0 // pred_check_branch
    %127 = sbr.rel (0) target = $region17
  $region16: #{model_forward.1} parent=0 // pred_region
    _
  $region17: #{model_forward.1} parent=0 // pred_fallthru
    _
  // Predicated region
  $region18: #{model_forward.1} parent=0 // pred_check
    _
  $region19: #{model_forward.1} parent=0 // pred_check_branch
    %129 = sbr.rel (0) target = $region21
  $region20: #{model_forward.1} parent=0 // pred_region
    _
  $region21: #{model_forward.1} parent=0 // pred_fallthru
    _

</llo_original>
